<compile_context>
chip_gen: v6e
topology: v6e:2x2x1
jax: 0.10.0
libtpu: 0.0.40
codegen_flags: <defaults>
</compile_context>

<pallas_src>
import jax
import jax.numpy as jnp
from jax.experimental import pallas as pl
from jax.experimental.pallas import tpu as pltpu


def critic_kernel(x_ref, w1_ref, b1_ref, w2_ref, b2_ref, w3_ref, b3_ref, o_ref):
    # fc1 + tanh (MXU matmul, f32 accumulate; x/w1 may be bf16-streamed)
    h = jnp.tanh(
        jnp.dot(x_ref[...], w1_ref[...], preferred_element_type=jnp.float32)
        + b1_ref[...]
    )
    # fc2 + tanh (f32 operands; W2 is VMEM-resident across all grid steps)
    h = jnp.tanh(
        jnp.dot(h, w2_ref[...], preferred_element_type=jnp.float32)
        + b2_ref[...]
    )
    # state_val head: VPU multiply against the single real w3 column + lane
    # reduce, then lay out lane-major as (1, tm) — no 128-wide zero slab.
    v = jnp.sum(h * w3_ref[...], axis=-1) + b3_ref[0, 0]
    o_ref[...] = v[None, :].astype(o_ref.dtype)


def _round_up(n, m):
    return ((n + m - 1) // m) * m


def _pad2(a, rows, cols):
    r, c = a.shape
    return jnp.pad(a, ((0, rows - r), (0, cols - c)))


def critic_forward(x, w1, b1, w2, b2, w3, b3, *, block_b=2048,
                   stream_dtype=jnp.bfloat16):
    """x: [B, n_inp]; w1: [n_inp, n_hidden]; b1: [1, n_hidden];
    w2: [n_hidden, n_hidden]; b2: [1, n_hidden]; w3: [n_hidden, 1];
    b3: [1, 1]  ->  [B, 1] state values.

    Weights are stored pre-transposed as [in, out] so the kernel computes
    x @ W. `stream_dtype` controls only the HBM-streamed operands (x, w1);
    everything else stays f32, with f32 accumulation throughout.
    (For peak bandwidth, pass x already in `stream_dtype` so the wrapper
    cast fuses into the producer.)
    """
    B, n_inp = x.shape
    n_hidden = w1.shape[1]

    Hp = _round_up(n_hidden, 128)  # hidden padded for vreg/MXU density

    # ---- batch tile selection ---------------------------------------------
    #  * pad < 1 tile for awkward B,
    #  * output-block lane dim is a multiple of 128 (unmasked stores) or
    #    equals the full padded batch (single-block case),
    #  * keep >= 2..4 grid steps for large B so "parallel" can use both
    #    TensorCores on dual-TC parts (v7x); harmless on v5e/v6e.
    if B <= 128:
        tm = _round_up(B, 8)                         # single block == full array
    else:
        num_blocks = max(-(-B // block_b), min(4, B // 128))
        tm = _round_up(-(-B // num_blocks), 128)
    Bp = _round_up(B, tm)
    grid = (Bp // tm,)

    # ---- operand packing ----------------------------------------------------
    # x keeps its TRUE feature dim in HBM: no inflated read stream. Zero row
    # padding of the batch is exact (extra rows are sliced off at the end).
    xp = _pad2(x, Bp, n_inp).astype(stream_dtype)
    w1p = _pad2(w1, n_inp, Hp).astype(stream_dtype)
    b1p = _pad2(b1, 1, Hp).astype(jnp.float32)
    w2p = _pad2(w2, Hp, Hp).astype(jnp.float32)
    b2p = _pad2(b2, 1, Hp).astype(jnp.float32)
    w3p = _pad2(w3.reshape(1, n_hidden), 1, Hp).astype(jnp.float32)  # row vector
    b3p = b3.reshape(1, 1).astype(jnp.float32)

    s_item = jnp.dtype(stream_dtype).itemsize
    cost = pl.CostEstimate(
        flops=2 * Bp * (n_inp * Hp + Hp * Hp + Hp),
        transcendentals=2 * Bp * Hp,
        bytes_accessed=(
            xp.size * s_item
            + w1p.size * s_item
            + (w2p.size + w3p.size + b1p.size + b2p.size + b3p.size) * 4
            + Bp * 4
        ),
    )

    out_padded = pl.pallas_call(
        critic_kernel,
        out_shape=jax.ShapeDtypeStruct((1, Bp), jnp.float32),
        grid_spec=pl.GridSpec(
            grid=grid,
            in_specs=[
                # x: streamed over the batch grid axis (double-buffered),
                # true (unpadded) feature dim.
                pl.BlockSpec((tm, n_inp), lambda i: (i, 0)),
                # weights / biases: constant index_map -> VMEM-resident.
                pl.BlockSpec((n_inp, Hp), lambda i: (0, 0)),
                pl.BlockSpec((1, Hp), lambda i: (0, 0)),
                pl.BlockSpec((Hp, Hp), lambda i: (0, 0)),
                pl.BlockSpec((1, Hp), lambda i: (0, 0)),
                pl.BlockSpec((1, Hp), lambda i: (0, 0)),
                pl.BlockSpec((1, 1), lambda i: (0, 0)),
            ],
            # Lane-major value output: each grid step writes a lane-dense
            # (1, tm) slab of the (1, Bp) result.
            out_specs=pl.BlockSpec((1, tm), lambda i: (0, i)),
        ),
        compiler_params=pltpu.CompilerParams(
            dimension_semantics=("parallel",),
        ),
        cost_estimate=cost,
    )(xp, w1p, b1p, w2p, b2p, w3p, b3p)

    # Strip batch padding; restore [B, 1] like the PyTorch module.
    return out_padded[0, :B].reshape(B, 1)


def init_critic_params(key, n_inp, n_hidden):
    """Deterministic init mirroring Critic.__init__:
      fc1:       PyTorch Linear default  W,b ~ U(-1/sqrt(n_inp), 1/sqrt(n_inp))
      fc2:       PyTorch Linear default  W,b ~ U(-1/sqrt(n_hidden), 1/sqrt(n_hidden))
      state_val: default weight * 0.1, bias * 0.0
    Weights are stored pre-transposed as [in, out] for the kernel.
    """
    k1, k2, k3, k4, k5 = jax.random.split(key, 5)
    y1 = 1.0 / jnp.sqrt(jnp.float32(n_inp))
    y2 = 1.0 / jnp.sqrt(jnp.float32(n_hidden))
    w1 = jax.random.uniform(k1, (n_inp, n_hidden), jnp.float32, -y1, y1)
    b1 = jax.random.uniform(k2, (1, n_hidden), jnp.float32, -y1, y1)
    w2 = jax.random.uniform(k3, (n_hidden, n_hidden), jnp.float32, -y2, y2)
    b2 = jax.random.uniform(k4, (1, n_hidden), jnp.float32, -y2, y2)
    w3 = 0.1 * jax.random.uniform(k5, (n_hidden, 1), jnp.float32, -y2, y2)
    b3 = jnp.zeros((1, 1), jnp.float32)
    return w1, b1, w2, b2, w3, b3


if __name__ == "__main__":
    B, n_inp, n_hidden = 2, 16, 32
    key = jax.random.PRNGKey(0)
    kx, kp = jax.random.split(key)
    x = jax.random.normal(kx, (B, n_inp), jnp.float32)
    params = init_critic_params(kp, n_inp, n_hidden)
    w1, b1, w2, b2, w3, b3 = params

    # Pure-JAX reference
    h = jnp.tanh(x @ w1 + b1)
    h = jnp.tanh(h @ w2 + b2)
    ref = h @ w3 + b3

    # Exact-parity f32 stream path
    out_f32 = critic_forward(x, *params, stream_dtype=jnp.float32)
    jax.block_until_ready(out_f32)
    assert out_f32.shape == (B, 1)
    assert jnp.allclose(out_f32, ref, atol=1e-4), "f32 kernel mismatch vs JAX reference"

    # Default bf16-streamed path (HBM-bandwidth lever on v6e/v7x; f32 accumulate)
    out_bf16 = critic_forward(x, *params)
    jax.block_until_ready(out_bf16)
    assert out_bf16.shape == (B, 1)
    assert jnp.allclose(out_bf16, ref, atol=2e-2), "bf16 kernel mismatch vs JAX reference"

    print("KERNEL_OK")
</pallas_src>

<mosaic_0001>
module attributes {stable_mosaic.version = 11 : i64} {
  func.func @critic_kernel(%arg0: i32, %arg1: memref<8x16xf32, #tpu.memory_space<vmem>>, %arg2: memref<16x128xf32, #tpu.memory_space<vmem>>, %arg3: memref<1x128xf32, #tpu.memory_space<vmem>>, %arg4: memref<128x128xf32, #tpu.memory_space<vmem>>, %arg5: memref<1x128xf32, #tpu.memory_space<vmem>>, %arg6: memref<1x128xf32, #tpu.memory_space<vmem>>, %arg7: memref<1x1xf32, #tpu.memory_space<vmem>>, %arg8: memref<1x8xf32, #tpu.memory_space<vmem>>) attributes {dimension_semantics = [#tpu.dimension_semantics<parallel>], iteration_bounds = array<i64: 1>, scalar_prefetch = 0 : i64, scratch_operands = 0 : i64, tpu.core_type = #tpu.core_type<tc>, window_params = [{transform_indices = @transform_0, window_bounds = array<i64: 8, 16>}, {pipeline_mode = #tpu.pipeline_mode<synchronous>, transform_indices = @transform_1, window_bounds = array<i64: 16, 128>}, {pipeline_mode = #tpu.pipeline_mode<synchronous>, transform_indices = @transform_2, window_bounds = array<i64: 1, 128>}, {pipeline_mode = #tpu.pipeline_mode<synchronous>, transform_indices = @transform_3, window_bounds = array<i64: 128, 128>}, {pipeline_mode = #tpu.pipeline_mode<synchronous>, transform_indices = @transform_4, window_bounds = array<i64: 1, 128>}, {pipeline_mode = #tpu.pipeline_mode<synchronous>, transform_indices = @transform_5, window_bounds = array<i64: 1, 128>}, {pipeline_mode = #tpu.pipeline_mode<synchronous>, transform_indices = @transform_6, window_bounds = array<i64: 1, 1>}, {transform_indices = @transform_7, window_bounds = array<i64: 1, 8>}]} {
    %c0 = arith.constant 0 : index
    %c0_0 = arith.constant 0 : index
    %0 = vector.load %arg1[%c0, %c0_0] : memref<8x16xf32, #tpu.memory_space<vmem>>, vector<8x16xf32>
    %c0_1 = arith.constant 0 : index
    %c0_2 = arith.constant 0 : index
    %1 = vector.load %arg2[%c0_1, %c0_2] : memref<16x128xf32, #tpu.memory_space<vmem>>, vector<16x128xf32>
    %cst = arith.constant dense<0.000000e+00> : vector<8x128xf32>
    %2 = tpu.matmul %0, %1, %cst {dimension_numbers = #tpu.dot_dimension_numbers<[1], [0], [0], [1], [0, 0, 1, 1], [], []>} : vector<8x16xf32>, vector<16x128xf32>, vector<8x128xf32> -> vector<8x128xf32>
    %c0_3 = arith.constant 0 : index
    %c0_4 = arith.constant 0 : index
    %3 = vector.load %arg3[%c0_3, %c0_4] : memref<1x128xf32, #tpu.memory_space<vmem>>, vector<1x128xf32>
    %4 = vector.broadcast %3 : vector<1x128xf32> to vector<8x128xf32>
    %5 = arith.addf %2, %4 : vector<8x128xf32>
    %6 = math.tanh %5 : vector<8x128xf32>
    %c0_5 = arith.constant 0 : index
    %c0_6 = arith.constant 0 : index
    %7 = vector.load %arg4[%c0_5, %c0_6] : memref<128x128xf32, #tpu.memory_space<vmem>>, vector<128x128xf32>
    %cst_7 = arith.constant dense<0.000000e+00> : vector<8x128xf32>
    %8 = tpu.matmul %6, %7, %cst_7 {dimension_numbers = #tpu.dot_dimension_numbers<[1], [0], [0], [1], [0, 0, 1, 1], [], []>} : vector<8x128xf32>, vector<128x128xf32>, vector<8x128xf32> -> vector<8x128xf32>
    %c0_8 = arith.constant 0 : index
    %c0_9 = arith.constant 0 : index
    %9 = vector.load %arg5[%c0_8, %c0_9] : memref<1x128xf32, #tpu.memory_space<vmem>>, vector<1x128xf32>
    %10 = vector.broadcast %9 : vector<1x128xf32> to vector<8x128xf32>
    %11 = arith.addf %8, %10 : vector<8x128xf32>
    %12 = math.tanh %11 : vector<8x128xf32>
    %c0_10 = arith.constant 0 : index
    %c0_11 = arith.constant 0 : index
    %13 = vector.load %arg6[%c0_10, %c0_11] : memref<1x128xf32, #tpu.memory_space<vmem>>, vector<1x128xf32>
    %14 = vector.broadcast %13 : vector<1x128xf32> to vector<8x128xf32>
    %15 = arith.mulf %12, %14 : vector<8x128xf32>
    %cst_12 = arith.constant dense<0.000000e+00> : vector<8xf32>
    %16 = vector.multi_reduction <add>, %15, %cst_12 [1] : vector<8x128xf32> to vector<8xf32>
    %c0_13 = arith.constant 0 : index
    %c0_14 = arith.constant 0 : index
    %17 = vector.load %arg7[%c0_13, %c0_14] : memref<1x1xf32, #tpu.memory_space<vmem>>, vector<1x1xf32>
    %18 = vector.extract %17[0, 0] : f32 from vector<1x1xf32>
    %19 = vector.broadcast %18 : f32 to vector<8xf32>
    %20 = arith.addf %16, %19 : vector<8xf32>
    %21 = vector.shape_cast %20 : vector<8xf32> to vector<1x8xf32>
    %c0_15 = arith.constant 0 : index
    %c0_16 = arith.constant 0 : index
    %22 = vector.load %arg8[%c0_15, %c0_16] : memref<1x8xf32, #tpu.memory_space<vmem>>, vector<1x8xf32>
    tpu.vector_store %arg8[%c0_15, %c0_16], %21 {strides = array<i32>} : memref<1x8xf32, #tpu.memory_space<vmem>>, vector<1x8xf32>,
    return
  }
  func.func @transform_0(%arg0: i32) -> (i32, i32) {
    %c0_i32 = arith.constant 0 : i32
    %c0_i32_0 = arith.constant 0 : i32
    return %arg0, %c0_i32 : i32, i32
  }
  func.func @transform_1(%arg0: i32) -> (i32, i32) {
    %c0_i32 = arith.constant 0 : i32
    %c0_i32_0 = arith.constant 0 : i32
    %c0_i32_1 = arith.constant 0 : i32
    return %c0_i32, %c0_i32_0 : i32, i32
  }
  func.func @transform_2(%arg0: i32) -> (i32, i32) {
    %c0_i32 = arith.constant 0 : i32
    %c0_i32_0 = arith.constant 0 : i32
    %c0_i32_1 = arith.constant 0 : i32
    return %c0_i32, %c0_i32_0 : i32, i32
  }
  func.func @transform_3(%arg0: i32) -> (i32, i32) {
    %c0_i32 = arith.constant 0 : i32
    %c0_i32_0 = arith.constant 0 : i32
    %c0_i32_1 = arith.constant 0 : i32
    return %c0_i32, %c0_i32_0 : i32, i32
  }
  func.func @transform_4(%arg0: i32) -> (i32, i32) {
    %c0_i32 = arith.constant 0 : i32
    %c0_i32_0 = arith.constant 0 : i32
    %c0_i32_1 = arith.constant 0 : i32
    return %c0_i32, %c0_i32_0 : i32, i32
  }
  func.func @transform_5(%arg0: i32) -> (i32, i32) {
    %c0_i32 = arith.constant 0 : i32
    %c0_i32_0 = arith.constant 0 : i32
    %c0_i32_1 = arith.constant 0 : i32
    return %c0_i32, %c0_i32_0 : i32, i32
  }
  func.func @transform_6(%arg0: i32) -> (i32, i32) {
    %c0_i32 = arith.constant 0 : i32
    %c0_i32_0 = arith.constant 0 : i32
    %c0_i32_1 = arith.constant 0 : i32
    return %c0_i32, %c0_i32_0 : i32, i32
  }
  func.func @transform_7(%arg0: i32) -> (i32, i32) {
    %c0_i32 = arith.constant 0 : i32
    %c0_i32_0 = arith.constant 0 : i32
    return %c0_i32, %arg0 : i32, i32
  }
}

</mosaic_0001>

<llo_original>
// kernel: tpu_custom_call.1
$region0: #{tpu_custom_call.1}
  #allocation0 [shape = 'u32[]', space=smem, size = 0x4, offset = 0x4, fixed_abs, tag = 'smem constant byte address 0x4 - core index']
  #allocation1 [shape = 'u32[144,128]{1,0:T(1,128)}', space=vmem, size = 0x12000, scoped, tag = 'internal scratch']
  #allocation2 [shape = 'f32[1,1]{1,0:T(1,128)S(1)}', space=vmem, size = 0x200, scoped, tag = 'scoped memory for tpu_custom_call.1']
  %s0 = inlined_call_operand.hbm [shape: f32[8,16], index: 0, kind: input, shape index: {}]
  %s1 = inlined_call_operand.hbm [shape: f32[16,128], index: 1, kind: input, shape index: {}]
  %s2 = inlined_call_operand.vmem [shape: f32[1,128], index: 2, kind: input, shape index: {}]
  %s3 = inlined_call_operand.hbm [shape: f32[128,128], index: 3, kind: input, shape index: {}]
  %s4 = inlined_call_operand.vmem [shape: f32[1,128], index: 4, kind: input, shape index: {}]
  %s5 = inlined_call_operand.vmem [shape: f32[1,128], index: 5, kind: input, shape index: {}]
  %s6 = inlined_call_operand.<no memory space> [shape: f32[1,1], index: 6, kind: input, shape index: {}]
  %s7 = inlined_call_operand.hbm [shape: f32[1,8], index: 7, kind: output, shape index: {}]
  %s8 = sld [smem:[#allocation0]]
  $region50: #{tpu_custom_call.1} parent=0
    _
  %s10 = ssub.s32 1, %s8
  %s11 = scalar_select 0, %s10, %s8
  %v12 = vstv %s6
  %13 = vst [vmem:[#allocation2] sm:$0x1] %v12
  $region1: #{tpu_custom_call.1} parent=0
    #allocation3 [shape = 'u8[4096]{0}', space=vmem, size = 0x1000, scoped, tag = 'input window, operand 0, single buffered']
    #allocation4 [shape = 's32[1]{0}', space=sflag, size = 0x4, scoped, tag = 'scoped memory for tpu_custom_call.1']
    #allocation5 [shape = 's32[1]{0}', space=sflag, size = 0x4, scoped, tag = 'scoped memory for tpu_custom_call.1']
    #allocation6 [shape = 'u8[8192]{0}', space=vmem, size = 0x2000, scoped, tag = 'input window, operand 1, single buffered']
    #allocation7 [shape = 's32[1]{0}', space=sflag, size = 0x4, scoped, tag = 'scoped memory for tpu_custom_call.1']
    #allocation8 [shape = 'u8[65536]{0}', space=vmem, size = 0x10000, scoped, tag = 'input window, operand 3, single buffered']
    #allocation9 [shape = 'u8[512]{0}', space=vmem, size = 0x400, scoped, tag = 'output window, operand 0, single buffered']
    %14 = vsyncpa [#allocation4], 0
    %15 = vsyncpa [#allocation7], 0
    %16 = vsyncpa [#allocation5], 0
    // Predicated region
    $region2: #{tpu_custom_call.1} parent=1 // pred_check
      _
    $region3: #{tpu_custom_call.1} parent=1 // pred_check_branch
      %18 = sbr.rel (0) target = $region5
    $region4: #{tpu_custom_call.1} parent=1 // pred_region
      %s20 = ssub.s32 128, 128
      %21 = vsyncadd [#allocation4], %s20
      %s23 = sshll.u32 [#allocation3], 4
      %s24 = int_to_ptr.vmem [resolvable:$true] %s23
      %26 = dma.hbm_to_vmem [thread:$0]  %s0, 128, %s24, [#allocation4]
    $region5: #{tpu_custom_call.1} parent=1 // pred_fallthru
      _
    // Predicated region
    $region6: #{tpu_custom_call.1} parent=1 // pred_check
      _
    $region7: #{tpu_custom_call.1} parent=1 // pred_check_branch
      %28 = sbr.rel (0) target = $region9
    $region8: #{tpu_custom_call.1} parent=1 // pred_region
      %s30 = ssub.s32 256, 256
      %31 = vsyncadd [#allocation7], %s30
      %s32 = sshll.u32 [#allocation6], 4
      %s33 = int_to_ptr.vmem [resolvable:$true] %s32
      %38 = dma.hbm_to_vmem [thread:$0]  %s1, 256, %s33, [#allocation7], 128, 128, 8
    $region9: #{tpu_custom_call.1} parent=1 // pred_fallthru
      _
    // Predicated region
    $region10: #{tpu_custom_call.1} parent=1 // pred_check
      _
    $region11: #{tpu_custom_call.1} parent=1 // pred_check_branch
      %40 = sbr.rel (0) target = $region13
    $region12: #{tpu_custom_call.1} parent=1 // pred_region
      _
    $region13: #{tpu_custom_call.1} parent=1 // pred_fallthru
      _
    // Predicated region
    $region14: #{tpu_custom_call.1} parent=1 // pred_check
      _
    $region15: #{tpu_custom_call.1} parent=1 // pred_check_branch
      %42 = sbr.rel (0) target = $region17
    $region16: #{tpu_custom_call.1} parent=1 // pred_region
      %s44 = ssub.s32 2048, 2048
      %45 = vsyncadd [#allocation7], %s44
      %s46 = sshll.u32 [#allocation8], 4
      %s47 = int_to_ptr.vmem [resolvable:$true] %s46
      %52 = dma.hbm_to_vmem [thread:$0]  %s3, 2048, %s47, [#allocation7], 128, 128, 8
    $region17: #{tpu_custom_call.1} parent=1 // pred_fallthru
      _
    // Predicated region
    $region18: #{tpu_custom_call.1} parent=1 // pred_check
      _
    $region19: #{tpu_custom_call.1} parent=1 // pred_check_branch
      %54 = sbr.rel (0) target = $region21
    $region20: #{tpu_custom_call.1} parent=1 // pred_region
      _
    $region21: #{tpu_custom_call.1} parent=1 // pred_fallthru
      _
    // Predicated region
    $region22: #{tpu_custom_call.1} parent=1 // pred_check
      _
    $region23: #{tpu_custom_call.1} parent=1 // pred_check_branch
      %56 = sbr.rel (0) target = $region25
    $region24: #{tpu_custom_call.1} parent=1 // pred_region
      _
    $region25: #{tpu_custom_call.1} parent=1 // pred_fallthru
      _
    // Predicated region
    $region26: #{tpu_custom_call.1} parent=1 // pred_check
      _
    $region27: #{tpu_custom_call.1} parent=1 // pred_check_branch
      %58 = sbr.rel (0) target = $region29
    $region28: #{tpu_custom_call.1} parent=1 // pred_region
      _
    $region29: #{tpu_custom_call.1} parent=1 // pred_fallthru
      _
    // Predicated region
    $region30: #{tpu_custom_call.1} parent=1 // pred_check
      _
    $region31: #{tpu_custom_call.1} parent=1 // pred_check_branch
      %60 = sbr.rel (0) target = $region33
    $region32: #{tpu_custom_call.1} parent=1 // pred_region
      %61 = dma.done [#allocation4], 128
    $region33: #{tpu_custom_call.1} parent=1 // pred_fallthru
      _
    // Predicated region
    $region34: #{tpu_custom_call.1} parent=1 // pred_check
      _
    $region35: #{tpu_custom_call.1} parent=1 // pred_check_branch
      %63 = sbr.rel (0) target = $region37
    $region36: #{tpu_custom_call.1} parent=1 // pred_region
      %64 = dma.done [#allocation7], 256
    $region37: #{tpu_custom_call.1} parent=1 // pred_fallthru
      _
    // Predicated region
    $region38: #{tpu_custom_call.1} parent=1 // pred_check
      _
    $region39: #{tpu_custom_call.1} parent=1 // pred_check_branch
      %66 = sbr.rel (0) target = $region41
    $region40: #{tpu_custom_call.1} parent=1 // pred_region
      %67 = dma.done [#allocation7], 2048
    $region41: #{tpu_custom_call.1} parent=1 // pred_fallthru
      _
    %v68 = vld [vmem:[#allocation3] sm:$0xff]
    %v69 = vld [vmem:[#allocation6] sm:$0xff]
    %v70 = vld [vmem:[#allocation6 + $0x8] sm:$0xff]
    %v71 = vld [vmem:[%s2] sm:$0x1]
    %v73 = vlaneseq
    %v74 = vshrl.u32 %v73, 7
    %v75 = vsub.s32 0, %v74
    %v76 = vrot.slane %v71, %v75
    %vm78 = vcmask 130048
    %v80 = vsel %vm78, %v68, 0
    %82 = vmatprep.subr.mxu0 0.0
    %83 = vmatpush1.msra.mxu0 0.0
    %84 = vmatprep.subr.mxu0 0.0
    %85 = vmatpush1.msra.mxu0 0.0
    %86 = vmatprep.subr.mxu0 0.0
    %87 = vmatpush1.msra.mxu0 0.0
    %88 = vmatprep.subr.mxu0 0.0
    %89 = vmatpush1.msra.mxu0 0.0
    %90 = vmatprep.subr.mxu0 0.0
    %91 = vmatpush1.msra.mxu0 0.0
    %92 = vmatprep.subr.mxu0 0.0
    %93 = vmatpush1.msra.mxu0 0.0
    %94 = vmatprep.subr.mxu0 0.0
    %95 = vmatpush1.msra.mxu0 0.0
    %96 = vmatprep.subr.mxu0 0.0
    %97 = vmatpush1.msra.mxu0 0.0
    %98 = vmatprep.subr.mxu0 0.0
    %99 = vmatpush1.msra.mxu0 0.0
    %100 = vmatprep.subr.mxu0 0.0
    %101 = vmatpush1.msra.mxu0 0.0
    %102 = vmatprep.subr.mxu0 0.0
    %103 = vmatpush1.msra.mxu0 0.0
    %104 = vmatprep.subr.mxu0 0.0
    %105 = vmatpush1.msra.mxu0 0.0
    %106 = vmatprep.subr.mxu0 0.0
    %107 = vmatpush1.msra.mxu0 0.0
    %108 = vmatprep.subr.mxu0 0.0
    %109 = vmatpush1.msra.mxu0 0.0
    %110 = vmatprep.subr.mxu0 0.0
    %111 = vmatpush1.msra.mxu0 %v70
    %112 = vmatprep.subr.mxu0 0.0
    %113 = vmatpush1.msra.mxu0 %v69
    %114 = vmatprep.subr.mxu0 0.0
    %115 = vmatpush2.msra.mxu0 0.0
    %116 = vmatprep.subr.mxu0 0.0
    %117 = vmatpush2.msra.mxu0 0.0
    %118 = vmatprep.subr.mxu0 0.0
    %119 = vmatpush2.msra.mxu0 0.0
    %120 = vmatprep.subr.mxu0 0.0
    %121 = vmatpush2.msra.mxu0 0.0
    %122 = vmatprep.subr.mxu0 0.0
    %123 = vmatpush2.msra.mxu0 0.0
    %124 = vmatprep.subr.mxu0 0.0
    %125 = vmatpush2.msra.mxu0 0.0
    %126 = vmatprep.subr.mxu0 0.0
    %127 = vmatpush2.msra.mxu0 0.0
    %128 = vmatprep.subr.mxu0 0.0
    %129 = vmatpush2.msra.mxu0 0.0
    %130 = vmatprep.subr.mxu0 0.0
    %131 = vmatpush2.msra.mxu0 0.0
    %132 = vmatprep.subr.mxu0 0.0
    %133 = vmatpush2.msra.mxu0 0.0
    %134 = vmatprep.subr.mxu0 0.0
    %135 = vmatpush2.msra.mxu0 0.0
    %136 = vmatprep.subr.mxu0 0.0
    %137 = vmatpush2.msra.mxu0 0.0
    %138 = vmatprep.subr.mxu0 0.0
    %139 = vmatpush2.msra.mxu0 0.0
    %140 = vmatprep.subr.mxu0 0.0
    %141 = vmatpush2.msra.mxu0 0.0
    %142 = vmatprep.subr.mxu0 0.0
    %143 = vmatpush2.msra.mxu0 0.0
    %144 = vmatprep.subr.mxu0 0.0
    %145 = vmatpush2.msra.mxu0 0.0
    %146 = vmatprep.mubr.f32.mxu0 0.0
    %147 = vmatmul.mubr.f32.gmra.mxu0 %v80
    %v148 = vpop.f32.mrf.mxu0
    %v149 = vadd.f32 %v76, %v148
    %v150 = vpop.f32.mrf.mxu0
    %151 = vdwg.mxu0
    %v152 = vtanh.pop %v149
    %v153 = vld [vmem:[#allocation8] sm:$0xff]
    %v154 = vld [vmem:[#allocation8 + $0x8] sm:$0xff]
    %v155 = vld [vmem:[#allocation8 + $0x10] sm:$0xff]
    %v156 = vld [vmem:[#allocation8 + $0x18] sm:$0xff]
    %v157 = vld [vmem:[#allocation8 + $0x20] sm:$0xff]
    %v158 = vld [vmem:[#allocation8 + $0x28] sm:$0xff]
    %v159 = vld [vmem:[#allocation8 + $0x30] sm:$0xff]
    %v160 = vld [vmem:[#allocation8 + $0x38] sm:$0xff]
    %v161 = vld [vmem:[#allocation8 + $0x40] sm:$0xff]
    %v162 = vld [vmem:[#allocation8 + $0x48] sm:$0xff]
    %v163 = vld [vmem:[#allocation8 + $0x50] sm:$0xff]
    %v164 = vld [vmem:[#allocation8 + $0x58] sm:$0xff]
    %v165 = vld [vmem:[#allocation8 + $0x60] sm:$0xff]
    %v166 = vld [vmem:[#allocation8 + $0x68] sm:$0xff]
    %v167 = vld [vmem:[#allocation8 + $0x70] sm:$0xff]
    %v168 = vld [vmem:[#allocation8 + $0x78] sm:$0xff]
    %v169 = vld [vmem:[%s4] sm:$0x1]
    %v171 = vlaneseq
    %v172 = vshrl.u32 %v171, 7
    %v173 = vsub.s32 0, %v172
    %v174 = vrot.slane %v169, %v173
    %176 = vmatprep.subr.mxu0 0.0
    %177 = vmatpush1.msra.mxu0 %v168
    %178 = vmatprep.subr.mxu0 0.0
    %179 = vmatpush1.msra.mxu0 %v167
    %180 = vmatprep.subr.mxu0 0.0
    %181 = vmatpush1.msra.mxu0 %v166
    %182 = vmatprep.subr.mxu0 0.0
    %183 = vmatpush1.msra.mxu0 %v165
    %184 = vmatprep.subr.mxu0 0.0
    %185 = vmatpush1.msra.mxu0 %v164
    %186 = vmatprep.subr.mxu0 0.0
    %187 = vmatpush1.msra.mxu0 %v163
    %188 = vmatprep.subr.mxu0 0.0
    %189 = vmatpush1.msra.mxu0 %v162
    %190 = vmatprep.subr.mxu0 0.0
    %191 = vmatpush1.msra.mxu0 %v161
    %192 = vmatprep.subr.mxu0 0.0
    %193 = vmatpush1.msra.mxu0 %v160
    %194 = vmatprep.subr.mxu0 0.0
    %195 = vmatpush1.msra.mxu0 %v159
    %196 = vmatprep.subr.mxu0 0.0
    %197 = vmatpush1.msra.mxu0 %v158
    %198 = vmatprep.subr.mxu0 0.0
    %199 = vmatpush1.msra.mxu0 %v157
    %200 = vmatprep.subr.mxu0 0.0
    %201 = vmatpush1.msra.mxu0 %v156
    %202 = vmatprep.subr.mxu0 0.0
    %203 = vmatpush1.msra.mxu0 %v155
    %204 = vmatprep.subr.mxu0 0.0
    %205 = vmatpush1.msra.mxu0 %v154
    %206 = vmatprep.subr.mxu0 0.0
    %207 = vmatpush1.msra.mxu0 %v153
    %208 = vmatprep.subr.mxu0 0.0
    %209 = vmatpush2.msra.mxu0 0.0
    %210 = vmatprep.subr.mxu0 0.0
    %211 = vmatpush2.msra.mxu0 0.0
    %212 = vmatprep.subr.mxu0 0.0
    %213 = vmatpush2.msra.mxu0 0.0
    %214 = vmatprep.subr.mxu0 0.0
    %215 = vmatpush2.msra.mxu0 0.0
    %216 = vmatprep.subr.mxu0 0.0
    %217 = vmatpush2.msra.mxu0 0.0
    %218 = vmatprep.subr.mxu0 0.0
    %219 = vmatpush2.msra.mxu0 0.0
    %220 = vmatprep.subr.mxu0 0.0
    %221 = vmatpush2.msra.mxu0 0.0
    %222 = vmatprep.subr.mxu0 0.0
    %223 = vmatpush2.msra.mxu0 0.0
    %224 = vmatprep.subr.mxu0 0.0
    %225 = vmatpush2.msra.mxu0 0.0
    %226 = vmatprep.subr.mxu0 0.0
    %227 = vmatpush2.msra.mxu0 0.0
    %228 = vmatprep.subr.mxu0 0.0
    %229 = vmatpush2.msra.mxu0 0.0
    %230 = vmatprep.subr.mxu0 0.0
    %231 = vmatpush2.msra.mxu0 0.0
    %232 = vmatprep.subr.mxu0 0.0
    %233 = vmatpush2.msra.mxu0 0.0
    %234 = vmatprep.subr.mxu0 0.0
    %235 = vmatpush2.msra.mxu0 0.0
    %236 = vmatprep.subr.mxu0 0.0
    %237 = vmatpush2.msra.mxu0 0.0
    %238 = vmatprep.subr.mxu0 0.0
    %239 = vmatpush2.msra.mxu0 0.0
    %240 = vmatprep.mubr.f32.mxu0 0.0
    %241 = vmatmul.mubr.f32.gmra.mxu0 %v152
    %v242 = vpop.f32.mrf.mxu0
    %v243 = vadd.f32 %v174, %v242
    %v244 = vpop.f32.mrf.mxu0
    %245 = vdwg.mxu0
    %v246 = vtanh.pop %v243
    %v247 = vld [vmem:[%s5] sm:$0x1]
    %v249 = vlaneseq
    %v250 = vshrl.u32 %v249, 7
    %v251 = vsub.s32 0, %v250
    %v252 = vrot.slane %v247, %v251
    %v254 = vmul.f32 %v246, %v252
    %255 = vadd.xlane.f32.xlu0 %v254
    %v256 = vpop.xlane.xlu0 %255
    %v257 = vld [vmem:[#allocation2] sm:$0x1]
    %s258 = vtos %v257
    %v259 = vstv %s258
    %v260 = vadd.f32 %v256, %v259
    %v262 = vlaneseq
    %v263 = vand.u32 %v262, 127
    %v264 = vlaneseq
    %v265 = vshrl.u32 %v264, 7
    %v266 = vsub.s32 %v263, %v265
    %v267 = vrot.slane %v260, %v266
    %vm269 = vcmask 57344
    %270 = vst.msk [vmem:[#allocation9] sm:$0x1] %vm269, %v267
    // Predicated region
    $region42: #{tpu_custom_call.1} parent=1 // pred_check
      _
    $region43: #{tpu_custom_call.1} parent=1 // pred_check_branch
      %272 = sbr.rel (0) target = $region45
    $region44: #{tpu_custom_call.1} parent=1 // pred_region
      %s274 = ssub.s32 16, 16
      %275 = vsyncadd [#allocation5], %s274
      %s277 = sshll.u32 [#allocation9], 4
      %s278 = int_to_ptr.vmem [resolvable:$true] %s277
      %280 = dma.vmem_to_hbm [thread:$0]  %s278, 16, %s7, [#allocation5]
    $region45: #{tpu_custom_call.1} parent=1 // pred_fallthru
      _
    // Predicated region
    $region46: #{tpu_custom_call.1} parent=1 // pred_check
      _
    $region47: #{tpu_custom_call.1} parent=1 // pred_check_branch
      %282 = sbr.rel (0) target = $region49
    $region48: #{tpu_custom_call.1} parent=1 // pred_region
      %283 = dma.done [#allocation5], 16
    $region49: #{tpu_custom_call.1} parent=1 // pred_fallthru
      _
    %284 = vsyncpa [#allocation4], 1
    %285 = vsyncpa [#allocation7], 1
    %286 = vsyncpa [#allocation5], 1

</llo_original>
